<compile_context>
chip_gen: v6e
topology: v6e:2x2x1
jax: 0.10.0
libtpu: 0.0.40
codegen_flags: <defaults>
</compile_context>

<pallas_src>
import functools

import jax
import jax.numpy as jnp
from jax import lax
from jax.experimental import pallas as pl
from jax.experimental.pallas import tpu as pltpu


def _round_up(x, m):
    return (x + m - 1) // m * m


def _pad_gate_cols(w_t, h, hp):
    """(rows, 4h) -> (rows, 4hp); gate block k placed at columns [k*hp, k*hp+h)."""
    rows = w_t.shape[0]
    out = jnp.zeros((rows, 4 * hp), w_t.dtype)
    for k in range(4):
        out = out.at[:, k * hp:k * hp + h].set(w_t[:, k * h:(k + 1) * h])
    return out


# ---------------------------------------------------------------------------
# Pass 1: hoisted input projection  G = X @ W_ih^T + (b_ih + b_hh)
# ---------------------------------------------------------------------------
def input_proj_kernel(x_ref, wih_ref, b_ref, g_ref):
    # x_ref: (Tc*Bp, D)   wih_ref: (D, 4Hp)   b_ref: (1, 4Hp)   g_ref: (Tc*Bp, 4Hp)
    g = jnp.dot(x_ref[...], wih_ref[...],
                preferred_element_type=jnp.float32) + b_ref[...]
    g_ref[...] = g


# ---------------------------------------------------------------------------
# Pass 2: serial recurrence over time chunks (+ fused final Linear)
# ---------------------------------------------------------------------------
def lstm_recurrent_kernel(g_ref, whh_ref, wlin_ref, blin_ref, out_ref,
                          h_scr, c_scr, *, t_real):
    tc = pl.program_id(0)
    t_chunk = g_ref.shape[0]
    _, hp = h_scr.shape
    needs_mask = (t_real % t_chunk) != 0   # static (Python) condition

    @pl.when(tc == 0)
    def _init():
        h_scr[...] = jnp.zeros_like(h_scr)
        c_scr[...] = jnp.zeros_like(c_scr)

    # Loop-invariant loads / constants, hoisted out of the timestep loop.
    whh = whh_ref[...]                                          # (Hp, 4Hp)
    col = lax.broadcasted_iota(jnp.int32, (1, 4 * hp), 1)
    is_g = jnp.logical_and(col >= 2 * hp, col < 3 * hp)
    # One-pass nonlinearity over the whole (Bp, 4Hp) tile:
    #   sigmoid for i/f/o;  tanh(x) = 2*sigmoid(2x) - 1 for the g gate.
    pre = jnp.where(is_g, 2.0, 1.0).astype(jnp.float32)
    post_m = pre
    post_b = jnp.where(is_g, -1.0, 0.0).astype(jnp.float32)

    def step(i, carry):
        h, c = carry
        gates = g_ref[i] + jnp.dot(h.astype(whh.dtype), whh,
                                   preferred_element_type=jnp.float32)
        act = jax.nn.sigmoid(gates * pre) * post_m + post_b     # (Bp, 4Hp)
        i_g = act[:, 0 * hp:1 * hp]
        f_g = act[:, 1 * hp:2 * hp]
        g_g = act[:, 2 * hp:3 * hp]
        o_g = act[:, 3 * hp:4 * hp]
        c_new = f_g * c + i_g * g_g
        h_new = o_g * jnp.tanh(c_new)
        if needs_mask:                        # only emitted when T % Tc != 0
            valid = (tc * t_chunk + i) < t_real
            h_new = jnp.where(valid, h_new, h)
            c_new = jnp.where(valid, c_new, c)
        return h_new, c_new

    h, c = lax.fori_loop(0, t_chunk, step, (h_scr[...], c_scr[...]),
                         unroll=True)
    h_scr[...] = h
    c_scr[...] = c

    @pl.when(tc == pl.num_programs(0) - 1)
    def _final():
        out_ref[...] = (jnp.dot(h.astype(wlin_ref.dtype), wlin_ref[...],
                                preferred_element_type=jnp.float32)
                        + blin_ref[...]).astype(out_ref.dtype)


def lstm_model_forward(x, params, *, compute_dtype=jnp.float32, t_chunk=8):
    """x: (B, T, D) batch_first, like the PyTorch module.  Returns (B, O)."""
    w_ih, w_hh, b_ih, b_hh, w_lin, b_lin = (
        params["w_ih"], params["w_hh"], params["b_ih"], params["b_hh"],
        params["w_lin"], params["b_lin"])
    B, T, D = x.shape
    H = w_hh.shape[1]
    O = w_lin.shape[0]

    Bp = _round_up(B, 8)           # sublane alignment
    Hp = _round_up(H, 128)         # lane alignment -> free gate slicing
    Op = _round_up(O, 128)         # lane-dense output store
    Tc = max(1, min(t_chunk, T))   # timesteps per grid step
    Tp = _round_up(T, Tc)
    n_chunks = Tp // Tc

    # ---- parameter repack: gate blocks at 128-aligned lane offsets ----
    wih_t = _pad_gate_cols(w_ih.T, H, Hp).astype(compute_dtype)      # (D, 4Hp)
    whh_t = jnp.pad(_pad_gate_cols(w_hh.T, H, Hp),
                    ((0, Hp - H), (0, 0))).astype(compute_dtype)     # (Hp, 4Hp)
    bias = _pad_gate_cols((b_ih + b_hh).reshape(1, 4 * H), H, Hp)    # (1, 4Hp) f32
    wlin_t = jnp.pad(w_lin.T, ((0, Hp - H), (0, Op - O))).astype(compute_dtype)
    blin = jnp.pad(b_lin.reshape(1, O), ((0, 0), (0, Op - O)))       # (1, Op) f32

    # ---- time-major, padded input, flattened to (Tp*Bp, D) GEMM rows ----
    x_tm = jnp.transpose(x, (1, 0, 2)).astype(compute_dtype)         # (T, B, D)
    x_tm = jnp.pad(x_tm, ((0, Tp - T), (0, Bp - B), (0, 0)))
    x_2d = x_tm.reshape(Tp * Bp, D)

    # ---- Pass 1: input projection as one big GEMM (parallel grid) ----
    g_2d = pl.pallas_call(
        input_proj_kernel,
        out_shape=jax.ShapeDtypeStruct((Tp * Bp, 4 * Hp), jnp.float32),
        grid_spec=pltpu.PrefetchScalarGridSpec(
            num_scalar_prefetch=0,
            grid=(n_chunks,),
            in_specs=[
                pl.BlockSpec((Tc * Bp, D), lambda t: (t, 0)),
                pl.BlockSpec((D, 4 * Hp), lambda t: (0, 0)),
                pl.BlockSpec((1, 4 * Hp), lambda t: (0, 0)),
            ],
            out_specs=pl.BlockSpec((Tc * Bp, 4 * Hp), lambda t: (t, 0)),
        ),
        compiler_params=pltpu.CompilerParams(
            dimension_semantics=("parallel",)),
    )(x_2d, wih_t, bias)
    g_slab = g_2d.reshape(Tp, Bp, 4 * Hp)

    # ---- Pass 2: serial recurrence + fused final Linear ----
    out_padded = pl.pallas_call(
        functools.partial(lstm_recurrent_kernel, t_real=T),
        out_shape=jax.ShapeDtypeStruct((Bp, Op), jnp.float32),
        grid_spec=pltpu.PrefetchScalarGridSpec(
            num_scalar_prefetch=0,
            grid=(n_chunks,),
            in_specs=[
                pl.BlockSpec((Tc, Bp, 4 * Hp), lambda t: (t, 0, 0)),
                # Loop-invariant weights (constant index maps -> fetched once).
                # TODO(synk): for very large H on v7x (64 MiB VMEM), single-
                # buffer these (pipeline_mode=pl.Buffered(1)) to halve residency.
                pl.BlockSpec((Hp, 4 * Hp), lambda t: (0, 0)),
                pl.BlockSpec((Hp, Op), lambda t: (0, 0)),
                pl.BlockSpec((1, Op), lambda t: (0, 0)),
            ],
            out_specs=pl.BlockSpec((Bp, Op), lambda t: (0, 0)),
            scratch_shapes=[
                pltpu.VMEM((Bp, Hp), jnp.float32),   # h state (fp32 always)
                pltpu.VMEM((Bp, Hp), jnp.float32),   # c state (fp32 always)
            ],
        ),
        compiler_params=pltpu.CompilerParams(
            dimension_semantics=("arbitrary",)),
    )(g_slab, whh_t, wlin_t, blin)

    return out_padded[:B, :O]


def lstm_model_reference(x, params):
    """Pure-JAX reference matching nn.LSTM(batch_first) + Linear(last step)."""
    w_ih, w_hh, b_ih, b_hh, w_lin, b_lin = (
        params["w_ih"], params["w_hh"], params["b_ih"], params["b_hh"],
        params["w_lin"], params["b_lin"])
    B, T, D = x.shape
    H = w_hh.shape[1]

    def step(carry, x_t):
        h, c = carry
        gates = x_t @ w_ih.T + b_ih + h @ w_hh.T + b_hh
        i = jax.nn.sigmoid(gates[:, 0:H])
        f = jax.nn.sigmoid(gates[:, H:2 * H])
        g = jnp.tanh(gates[:, 2 * H:3 * H])
        o = jax.nn.sigmoid(gates[:, 3 * H:4 * H])
        c = f * c + i * g
        h = o * jnp.tanh(c)
        return (h, c), None

    h0 = jnp.zeros((B, H), jnp.float32)
    c0 = jnp.zeros((B, H), jnp.float32)
    (h_last, _), _ = lax.scan(step, (h0, c0), jnp.transpose(x, (1, 0, 2)))
    return h_last @ w_lin.T + b_lin


def init_params(key, input_dim, hidden_dim, output_dim):
    """Deterministic init mimicking PyTorch's uniform(-1/sqrt(H), 1/sqrt(H))."""
    ks = jax.random.split(key, 6)
    k = 1.0 / jnp.sqrt(hidden_dim)
    u = lambda kk, shape: jax.random.uniform(kk, shape, jnp.float32, -k, k)
    return {
        "w_ih": u(ks[0], (4 * hidden_dim, input_dim)),
        "w_hh": u(ks[1], (4 * hidden_dim, hidden_dim)),
        "b_ih": u(ks[2], (4 * hidden_dim,)),
        "b_hh": u(ks[3], (4 * hidden_dim,)),
        "w_lin": u(ks[4], (output_dim, hidden_dim)),
        "b_lin": u(ks[5], (output_dim,)),
    }


if __name__ == "__main__":
    B, T, D, H, O = 2, 8, 16, 32, 1

    key = jax.random.PRNGKey(0)
    k_x, k_p = jax.random.split(key)
    x = jax.random.normal(k_x, (B, T, D), jnp.float32)
    params = init_params(k_p, D, H, O)

    ref = lstm_model_reference(x, params)

    # fp32 path (matches PyTorch numerics).
    out = jax.block_until_ready(lstm_model_forward(x, params))
    assert out.shape == (B, O)
    assert jnp.allclose(out, ref, atol=1e-4, rtol=1e-4), (out, ref)

    # bf16-weight / fp32-accumulate fast path (v6e/v7x).
    out_bf16 = jax.block_until_ready(
        lstm_model_forward(x, params, compute_dtype=jnp.bfloat16))
    assert out_bf16.shape == (B, O)
    assert jnp.allclose(out_bf16, ref, atol=1e-1, rtol=1e-1), (out_bf16, ref)

    print("KERNEL_OK")
</pallas_src>

<mosaic_0001>
module attributes {stable_mosaic.version = 11 : i64} {
  func.func @input_proj_kernel(%arg0: i32, %arg1: memref<64x16xf32, #tpu.memory_space<vmem>>, %arg2: memref<16x512xf32, #tpu.memory_space<vmem>>, %arg3: memref<1x512xf32, #tpu.memory_space<vmem>>, %arg4: memref<64x512xf32, #tpu.memory_space<vmem>>) attributes {dimension_semantics = [#tpu.dimension_semantics<parallel>], iteration_bounds = array<i64: 1>, scalar_prefetch = 0 : i64, scratch_operands = 0 : i64, tpu.core_type = #tpu.core_type<tc>, window_params = [{transform_indices = @transform_0, window_bounds = array<i64: 64, 16>}, {pipeline_mode = #tpu.pipeline_mode<synchronous>, transform_indices = @transform_1, window_bounds = array<i64: 16, 512>}, {pipeline_mode = #tpu.pipeline_mode<synchronous>, transform_indices = @transform_2, window_bounds = array<i64: 1, 512>}, {transform_indices = @transform_3, window_bounds = array<i64: 64, 512>}]} {
    %c0 = arith.constant 0 : index
    %c0_0 = arith.constant 0 : index
    %0 = vector.load %arg1[%c0, %c0_0] : memref<64x16xf32, #tpu.memory_space<vmem>>, vector<64x16xf32>
    %c0_1 = arith.constant 0 : index
    %c0_2 = arith.constant 0 : index
    %1 = vector.load %arg2[%c0_1, %c0_2] : memref<16x512xf32, #tpu.memory_space<vmem>>, vector<16x512xf32>
    %cst = arith.constant dense<0.000000e+00> : vector<64x512xf32>
    %2 = tpu.matmul %0, %1, %cst {dimension_numbers = #tpu.dot_dimension_numbers<[1], [0], [0], [1], [0, 0, 1, 1], [], []>} : vector<64x16xf32>, vector<16x512xf32>, vector<64x512xf32> -> vector<64x512xf32>
    %c0_3 = arith.constant 0 : index
    %c0_4 = arith.constant 0 : index
    %3 = vector.load %arg3[%c0_3, %c0_4] : memref<1x512xf32, #tpu.memory_space<vmem>>, vector<1x512xf32>
    %4 = vector.broadcast %3 : vector<1x512xf32> to vector<64x512xf32>
    %5 = arith.addf %2, %4 : vector<64x512xf32>
    %c0_5 = arith.constant 0 : index
    %c0_6 = arith.constant 0 : index
    %6 = vector.load %arg4[%c0_5, %c0_6] : memref<64x512xf32, #tpu.memory_space<vmem>>, vector<64x512xf32>
    tpu.vector_store %arg4[%c0_5, %c0_6], %5 {strides = array<i32>} : memref<64x512xf32, #tpu.memory_space<vmem>>, vector<64x512xf32>,
    return
  }
  func.func @transform_0(%arg0: i32) -> (i32, i32) {
    %c0_i32 = arith.constant 0 : i32
    %c0_i32_0 = arith.constant 0 : i32
    return %arg0, %c0_i32 : i32, i32
  }
  func.func @transform_1(%arg0: i32) -> (i32, i32) {
    %c0_i32 = arith.constant 0 : i32
    %c0_i32_0 = arith.constant 0 : i32
    %c0_i32_1 = arith.constant 0 : i32
    return %c0_i32, %c0_i32_0 : i32, i32
  }
  func.func @transform_2(%arg0: i32) -> (i32, i32) {
    %c0_i32 = arith.constant 0 : i32
    %c0_i32_0 = arith.constant 0 : i32
    %c0_i32_1 = arith.constant 0 : i32
    return %c0_i32, %c0_i32_0 : i32, i32
  }
  func.func @transform_3(%arg0: i32) -> (i32, i32) {
    %c0_i32 = arith.constant 0 : i32
    %c0_i32_0 = arith.constant 0 : i32
    return %arg0, %c0_i32 : i32, i32
  }
}

</mosaic_0001>

<llo_original>
// kernel: tpu_custom_call.1
$region0: #{tpu_custom_call.1}
  #allocation0 [shape = 'u32[]', space=smem, size = 0x4, offset = 0x4, fixed_abs, tag = 'smem constant byte address 0x4 - core index']
  #allocation1 [shape = 'u32[144,128]{1,0:T(1,128)}', space=vmem, size = 0x12000, scoped, tag = 'internal scratch']
  %s0 = inlined_call_operand.vmem [shape: f32[64,16], index: 0, kind: input, shape index: {}]
  %s1 = inlined_call_operand.vmem [shape: f32[16,512], index: 1, kind: input, shape index: {}]
  %s2 = inlined_call_operand.vmem [shape: f32[1,512], index: 2, kind: input, shape index: {}]
  %s3 = inlined_call_operand.hbm [shape: f32[64,512], index: 3, kind: output, shape index: {}]
  %s4 = sld [smem:[#allocation0]]
  $region22: #{tpu_custom_call.1} parent=0
    _
  %s6 = ssub.s32 1, %s4
  %s7 = scalar_select 0, %s6, %s4
  $region1: #{tpu_custom_call.1} parent=0
    #allocation2 [shape = 'u8[131072]{0}', space=vmem, size = 0x20000, scoped, tag = 'output window, operand 0, single buffered']
    #allocation3 [shape = 's32[1]{0}', space=sflag, size = 0x4, scoped, tag = 'scoped memory for tpu_custom_call.1']
    %8 = vsyncpa [#allocation3], 0
    // Predicated region
    $region2: #{tpu_custom_call.1} parent=1 // pred_check
      _
    $region3: #{tpu_custom_call.1} parent=1 // pred_check_branch
      %10 = sbr.rel (0) target = $region5
    $region4: #{tpu_custom_call.1} parent=1 // pred_region
      _
    $region5: #{tpu_custom_call.1} parent=1 // pred_fallthru
      _
    // Predicated region
    $region6: #{tpu_custom_call.1} parent=1 // pred_check
      _
    $region7: #{tpu_custom_call.1} parent=1 // pred_check_branch
      %12 = sbr.rel (0) target = $region9
    $region8: #{tpu_custom_call.1} parent=1 // pred_region
      _
    $region9: #{tpu_custom_call.1} parent=1 // pred_fallthru
      _
    // Predicated region
    $region10: #{tpu_custom_call.1} parent=1 // pred_check
      _
    $region11: #{tpu_custom_call.1} parent=1 // pred_check_branch
      %14 = sbr.rel (0) target = $region13
    $region12: #{tpu_custom_call.1} parent=1 // pred_region
      _
    $region13: #{tpu_custom_call.1} parent=1 // pred_fallthru
      _
    %v15 = vld [vmem:[%s0] sm:$0xff]
    %v16 = vld [vmem:[%s0 + $0x8] sm:$0xff]
    %v17 = vld [vmem:[%s0 + $0x10] sm:$0xff]
    %v18 = vld [vmem:[%s0 + $0x18] sm:$0xff]
    %v19 = vld [vmem:[%s0 + $0x20] sm:$0xff]
    %v20 = vld [vmem:[%s0 + $0x28] sm:$0xff]
    %v21 = vld [vmem:[%s0 + $0x30] sm:$0xff]
    %v22 = vld [vmem:[%s0 + $0x38] sm:$0xff]
    %v23 = vld [vmem:[%s1] sm:$0xff]
    %v24 = vld [vmem:[%s1 + $0x8] sm:$0xff]
    %v25 = vld [vmem:[%s1 + $0x10] sm:$0xff]
    %v26 = vld [vmem:[%s1 + $0x18] sm:$0xff]
    %v27 = vld [vmem:[%s1 + $0x20] sm:$0xff]
    %v28 = vld [vmem:[%s1 + $0x28] sm:$0xff]
    %v29 = vld [vmem:[%s1 + $0x30] sm:$0xff]
    %v30 = vld [vmem:[%s1 + $0x38] sm:$0xff]
    %v31 = vld [vmem:[%s2] sm:$0xf]
    %v33 = vlaneseq
    %v34 = vshrl.u32 %v33, 7
    %v35 = vsub.s32 0, %v34
    %v36 = vrot.slane %v31, %v35
    %v37 = vlaneseq
    %v38 = vshrl.u32 %v37, 7
    %v39 = vsub.s32 1, %v38
    %v40 = vrot.slane %v31, %v39
    %v41 = vlaneseq
    %v42 = vshrl.u32 %v41, 7
    %v43 = vsub.s32 2, %v42
    %v44 = vrot.slane %v31, %v43
    %v45 = vlaneseq
    %v46 = vshrl.u32 %v45, 7
    %v47 = vsub.s32 3, %v46
    %v48 = vrot.slane %v31, %v47
    %vm53 = vcmask 130048
    %v55 = vsel %vm53, %v15, 0
    %v58 = vsel %vm53, %v16, 0
    %v61 = vsel %vm53, %v17, 0
    %v64 = vsel %vm53, %v18, 0
    %v67 = vsel %vm53, %v19, 0
    %v70 = vsel %vm53, %v20, 0
    %v73 = vsel %vm53, %v21, 0
    %v76 = vsel %vm53, %v22, 0
    %78 = vmatprep.subr.mxu0 0.0
    %79 = vmatpush1.msra.mxu0 0.0
    %80 = vmatprep.subr.mxu0 0.0
    %81 = vmatpush1.msra.mxu0 0.0
    %82 = vmatprep.subr.mxu0 0.0
    %83 = vmatpush1.msra.mxu0 0.0
    %84 = vmatprep.subr.mxu0 0.0
    %85 = vmatpush1.msra.mxu0 0.0
    %86 = vmatprep.subr.mxu0 0.0
    %87 = vmatpush1.msra.mxu0 0.0
    %88 = vmatprep.subr.mxu0 0.0
    %89 = vmatpush1.msra.mxu0 0.0
    %90 = vmatprep.subr.mxu0 0.0
    %91 = vmatpush1.msra.mxu0 0.0
    %92 = vmatprep.subr.mxu0 0.0
    %93 = vmatpush1.msra.mxu0 0.0
    %94 = vmatprep.subr.mxu0 0.0
    %95 = vmatpush1.msra.mxu0 0.0
    %96 = vmatprep.subr.mxu0 0.0
    %97 = vmatpush1.msra.mxu0 0.0
    %98 = vmatprep.subr.mxu0 0.0
    %99 = vmatpush1.msra.mxu0 0.0
    %100 = vmatprep.subr.mxu0 0.0
    %101 = vmatpush1.msra.mxu0 0.0
    %102 = vmatprep.subr.mxu0 0.0
    %103 = vmatpush1.msra.mxu0 0.0
    %104 = vmatprep.subr.mxu0 0.0
    %105 = vmatpush1.msra.mxu0 0.0
    %106 = vmatprep.subr.mxu0 %v28
    %107 = vmatpush1.msra.mxu0 %v27
    %108 = vmatprep.subr.mxu0 %v24
    %109 = vmatpush1.msra.mxu0 %v23
    %110 = vmatprep.subr.mxu0 0.0
    %111 = vmatpush2.msra.mxu0 0.0
    %112 = vmatprep.subr.mxu0 0.0
    %113 = vmatpush2.msra.mxu0 0.0
    %114 = vmatprep.subr.mxu0 0.0
    %115 = vmatpush2.msra.mxu0 0.0
    %116 = vmatprep.subr.mxu0 0.0
    %117 = vmatpush2.msra.mxu0 0.0
    %118 = vmatprep.subr.mxu0 0.0
    %119 = vmatpush2.msra.mxu0 0.0
    %120 = vmatprep.subr.mxu0 0.0
    %121 = vmatpush2.msra.mxu0 0.0
    %122 = vmatprep.subr.mxu0 0.0
    %123 = vmatpush2.msra.mxu0 0.0
    %124 = vmatprep.subr.mxu0 0.0
    %125 = vmatpush2.msra.mxu0 0.0
    %126 = vmatprep.subr.mxu0 0.0
    %127 = vmatpush2.msra.mxu0 0.0
    %128 = vmatprep.subr.mxu0 0.0
    %129 = vmatpush2.msra.mxu0 0.0
    %130 = vmatprep.subr.mxu0 0.0
    %131 = vmatpush2.msra.mxu0 0.0
    %132 = vmatprep.subr.mxu0 0.0
    %133 = vmatpush2.msra.mxu0 0.0
    %134 = vmatprep.subr.mxu0 0.0
    %135 = vmatpush2.msra.mxu0 0.0
    %136 = vmatprep.subr.mxu0 0.0
    %137 = vmatpush2.msra.mxu0 0.0
    %138 = vmatprep.subr.mxu0 0.0
    %139 = vmatpush2.msra.mxu0 0.0
    %140 = vmatprep.subr.mxu0 0.0
    %141 = vmatpush2.msra.mxu0 0.0
    %142 = vmatprep.mubr.f32.mxu0 0.0
    %143 = vmatmul.mubr.f32.gmra.mxu0 %v55
    %v144 = vpop.f32.mrf.mxu0
    %v145 = vadd.f32 %v36, %v144
    %v146 = vpop.f32.mrf.mxu0
    %v147 = vadd.f32 %v40, %v146
    %148 = vmatprep.mubr.f32.mxu0 0.0
    %149 = vmatmul.mubr.f32.gmra.mxu0 %v58
    %v150 = vpop.f32.mrf.mxu0
    %v151 = vadd.f32 %v36, %v150
    %v152 = vpop.f32.mrf.mxu0
    %v153 = vadd.f32 %v40, %v152
    %154 = vmatprep.mubr.f32.mxu0 0.0
    %155 = vmatmul.mubr.f32.gmra.mxu0 %v61
    %v156 = vpop.f32.mrf.mxu0
    %v157 = vadd.f32 %v36, %v156
    %v158 = vpop.f32.mrf.mxu0
    %v159 = vadd.f32 %v40, %v158
    %160 = vmatprep.mubr.f32.mxu0 0.0
    %161 = vmatmul.mubr.f32.gmra.mxu0 %v64
    %v162 = vpop.f32.mrf.mxu0
    %v163 = vadd.f32 %v36, %v162
    %v164 = vpop.f32.mrf.mxu0
    %v165 = vadd.f32 %v40, %v164
    %166 = vmatprep.mubr.f32.mxu0 0.0
    %167 = vmatmul.mubr.f32.gmra.mxu0 %v67
    %v168 = vpop.f32.mrf.mxu0
    %v169 = vadd.f32 %v36, %v168
    %v170 = vpop.f32.mrf.mxu0
    %v171 = vadd.f32 %v40, %v170
    %172 = vmatprep.mubr.f32.mxu0 0.0
    %173 = vmatmul.mubr.f32.gmra.mxu0 %v70
    %v174 = vpop.f32.mrf.mxu0
    %v175 = vadd.f32 %v36, %v174
    %v176 = vpop.f32.mrf.mxu0
    %v177 = vadd.f32 %v40, %v176
    %178 = vmatprep.mubr.f32.mxu0 0.0
    %179 = vmatmul.mubr.f32.gmra.mxu0 %v73
    %v180 = vpop.f32.mrf.mxu0
    %v181 = vadd.f32 %v36, %v180
    %v182 = vpop.f32.mrf.mxu0
    %v183 = vadd.f32 %v40, %v182
    %184 = vmatprep.mubr.f32.mxu0 0.0
    %185 = vmatmul.mubr.f32.gmra.mxu0 %v76
    %v186 = vpop.f32.mrf.mxu0
    %v187 = vadd.f32 %v36, %v186
    %v188 = vpop.f32.mrf.mxu0
    %v189 = vadd.f32 %v40, %v188
    %190 = vdwg.mxu0
    %191 = vmatprep.subr.mxu0 0.0
    %192 = vmatpush1.msra.mxu0 0.0
    %193 = vmatprep.subr.mxu0 0.0
    %194 = vmatpush1.msra.mxu0 0.0
    %195 = vmatprep.subr.mxu0 0.0
    %196 = vmatpush1.msra.mxu0 0.0
    %197 = vmatprep.subr.mxu0 0.0
    %198 = vmatpush1.msra.mxu0 0.0
    %199 = vmatprep.subr.mxu0 0.0
    %200 = vmatpush1.msra.mxu0 0.0
    %201 = vmatprep.subr.mxu0 0.0
    %202 = vmatpush1.msra.mxu0 0.0
    %203 = vmatprep.subr.mxu0 0.0
    %204 = vmatpush1.msra.mxu0 0.0
    %205 = vmatprep.subr.mxu0 0.0
    %206 = vmatpush1.msra.mxu0 0.0
    %207 = vmatprep.subr.mxu0 0.0
    %208 = vmatpush1.msra.mxu0 0.0
    %209 = vmatprep.subr.mxu0 0.0
    %210 = vmatpush1.msra.mxu0 0.0
    %211 = vmatprep.subr.mxu0 0.0
    %212 = vmatpush1.msra.mxu0 0.0
    %213 = vmatprep.subr.mxu0 0.0
    %214 = vmatpush1.msra.mxu0 0.0
    %215 = vmatprep.subr.mxu0 0.0
    %216 = vmatpush1.msra.mxu0 0.0
    %217 = vmatprep.subr.mxu0 0.0
    %218 = vmatpush1.msra.mxu0 0.0
    %219 = vmatprep.subr.mxu0 %v30
    %220 = vmatpush1.msra.mxu0 %v29
    %221 = vmatprep.subr.mxu0 %v26
    %222 = vmatpush1.msra.mxu0 %v25
    %223 = vmatprep.subr.mxu0 0.0
    %224 = vmatpush2.msra.mxu0 0.0
    %225 = vmatprep.subr.mxu0 0.0
    %226 = vmatpush2.msra.mxu0 0.0
    %227 = vmatprep.subr.mxu0 0.0
    %228 = vmatpush2.msra.mxu0 0.0
    %229 = vmatprep.subr.mxu0 0.0
    %230 = vmatpush2.msra.mxu0 0.0
    %231 = vmatprep.subr.mxu0 0.0
    %232 = vmatpush2.msra.mxu0 0.0
    %233 = vmatprep.subr.mxu0 0.0
    %234 = vmatpush2.msra.mxu0 0.0
    %235 = vmatprep.subr.mxu0 0.0
    %236 = vmatpush2.msra.mxu0 0.0
    %237 = vmatprep.subr.mxu0 0.0
    %238 = vmatpush2.msra.mxu0 0.0
    %239 = vmatprep.subr.mxu0 0.0
    %240 = vmatpush2.msra.mxu0 0.0
    %241 = vmatprep.subr.mxu0 0.0
    %242 = vmatpush2.msra.mxu0 0.0
    %243 = vmatprep.subr.mxu0 0.0
    %244 = vmatpush2.msra.mxu0 0.0
    %245 = vmatprep.subr.mxu0 0.0
    %246 = vmatpush2.msra.mxu0 0.0
    %247 = vmatprep.subr.mxu0 0.0
    %248 = vmatpush2.msra.mxu0 0.0
    %249 = vmatprep.subr.mxu0 0.0
    %250 = vmatpush2.msra.mxu0 0.0
    %251 = vmatprep.subr.mxu0 0.0
    %252 = vmatpush2.msra.mxu0 0.0
    %253 = vmatprep.subr.mxu0 0.0
    %254 = vmatpush2.msra.mxu0 0.0
    %255 = vmatprep.mubr.f32.mxu0 0.0
    %256 = vmatmul.mubr.f32.gmra.mxu0 %v55
    %v257 = vpop.f32.mrf.mxu0
    %v258 = vadd.f32 %v44, %v257
    %v259 = vpop.f32.mrf.mxu0
    %v260 = vadd.f32 %v48, %v259
    %261 = vmatprep.mubr.f32.mxu0 0.0
    %262 = vmatmul.mubr.f32.gmra.mxu0 %v58
    %v263 = vpop.f32.mrf.mxu0
    %v264 = vadd.f32 %v44, %v263
    %v265 = vpop.f32.mrf.mxu0
    %v266 = vadd.f32 %v48, %v265
    %267 = vmatprep.mubr.f32.mxu0 0.0
    %268 = vmatmul.mubr.f32.gmra.mxu0 %v61
    %v269 = vpop.f32.mrf.mxu0
    %v270 = vadd.f32 %v44, %v269
    %v271 = vpop.f32.mrf.mxu0
    %v272 = vadd.f32 %v48, %v271
    %273 = vmatprep.mubr.f32.mxu0 0.0
    %274 = vmatmul.mubr.f32.gmra.mxu0 %v64
    %v275 = vpop.f32.mrf.mxu0
    %v276 = vadd.f32 %v44, %v275
    %v277 = vpop.f32.mrf.mxu0
    %v278 = vadd.f32 %v48, %v277
    %279 = vmatprep.mubr.f32.mxu0 0.0
    %280 = vmatmul.mubr.f32.gmra.mxu0 %v67
    %v281 = vpop.f32.mrf.mxu0
    %v282 = vadd.f32 %v44, %v281
    %v283 = vpop.f32.mrf.mxu0
    %v284 = vadd.f32 %v48, %v283
    %285 = vmatprep.mubr.f32.mxu0 0.0
    %286 = vmatmul.mubr.f32.gmra.mxu0 %v70
    %v287 = vpop.f32.mrf.mxu0
    %v288 = vadd.f32 %v44, %v287
    %v289 = vpop.f32.mrf.mxu0
    %v290 = vadd.f32 %v48, %v289
    %291 = vmatprep.mubr.f32.mxu0 0.0
    %292 = vmatmul.mubr.f32.gmra.mxu0 %v73
    %v293 = vpop.f32.mrf.mxu0
    %v294 = vadd.f32 %v44, %v293
    %v295 = vpop.f32.mrf.mxu0
    %v296 = vadd.f32 %v48, %v295
    %297 = vmatprep.mubr.f32.mxu0 0.0
    %298 = vmatmul.mubr.f32.gmra.mxu0 %v76
    %v299 = vpop.f32.mrf.mxu0
    %v300 = vadd.f32 %v44, %v299
    %v301 = vpop.f32.mrf.mxu0
    %v302 = vadd.f32 %v48, %v301
    %303 = vdwg.mxu0
    %304 = vst [vmem:[#allocation2] sm:$0xff] %v145
    %305 = vst [vmem:[#allocation2 + $0x8] sm:$0xff] %v147
    %306 = vst [vmem:[#allocation2 + $0x10] sm:$0xff] %v258
    %307 = vst [vmem:[#allocation2 + $0x18] sm:$0xff] %v260
    %308 = vst [vmem:[#allocation2 + $0x20] sm:$0xff] %v151
    %309 = vst [vmem:[#allocation2 + $0x28] sm:$0xff] %v153
    %310 = vst [vmem:[#allocation2 + $0x30] sm:$0xff] %v264
    %311 = vst [vmem:[#allocation2 + $0x38] sm:$0xff] %v266
    %312 = vst [vmem:[#allocation2 + $0x40] sm:$0xff] %v157
    %313 = vst [vmem:[#allocation2 + $0x48] sm:$0xff] %v159
    %314 = vst [vmem:[#allocation2 + $0x50] sm:$0xff] %v270
    %315 = vst [vmem:[#allocation2 + $0x58] sm:$0xff] %v272
    %316 = vst [vmem:[#allocation2 + $0x60] sm:$0xff] %v163
    %317 = vst [vmem:[#allocation2 + $0x68] sm:$0xff] %v165
    %318 = vst [vmem:[#allocation2 + $0x70] sm:$0xff] %v276
    %319 = vst [vmem:[#allocation2 + $0x78] sm:$0xff] %v278
    %320 = vst [vmem:[#allocation2 + $0x80] sm:$0xff] %v169
    %321 = vst [vmem:[#allocation2 + $0x88] sm:$0xff] %v171
    %322 = vst [vmem:[#allocation2 + $0x90] sm:$0xff] %v282
    %323 = vst [vmem:[#allocation2 + $0x98] sm:$0xff] %v284
    %324 = vst [vmem:[#allocation2 + $0xa0] sm:$0xff] %v175
    %325 = vst [vmem:[#allocation2 + $0xa8] sm:$0xff] %v177
    %326 = vst [vmem:[#allocation2 + $0xb0] sm:$0xff] %v288
    %327 = vst [vmem:[#allocation2 + $0xb8] sm:$0xff] %v290
    %328 = vst [vmem:[#allocation2 + $0xc0] sm:$0xff] %v181
    %329 = vst [vmem:[#allocation2 + $0xc8] sm:$0xff] %v183
    %330 = vst [vmem:[#allocation2 + $0xd0] sm:$0xff] %v294
    %331 = vst [vmem:[#allocation2 + $0xd8] sm:$0xff] %v296
    %332 = vst [vmem:[#allocation2 + $0xe0] sm:$0xff] %v187
    %333 = vst [vmem:[#allocation2 + $0xe8] sm:$0xff] %v189
    %334 = vst [vmem:[#allocation2 + $0xf0] sm:$0xff] %v300
    %335 = vst [vmem:[#allocation2 + $0xf8] sm:$0xff] %v302
    // Predicated region
    $region14: #{tpu_custom_call.1} parent=1 // pred_check
      _
    $region15: #{tpu_custom_call.1} parent=1 // pred_check_branch
      %337 = sbr.rel (0) target = $region17
    $region16: #{tpu_custom_call.1} parent=1 // pred_region
      %s339 = ssub.s32 4096, 4096
      %340 = vsyncadd [#allocation3], %s339
      %s341 = sshll.u32 [#allocation2], 4
      %s342 = int_to_ptr.vmem [resolvable:$true] %s341
      %347 = dma.vmem_to_hbm [thread:$0]  %s342, 4096, %s3, [#allocation3], 512, 512, 32
    $region17: #{tpu_custom_call.1} parent=1 // pred_fallthru
      _
    // Predicated region
    $region18: #{tpu_custom_call.1} parent=1 // pred_check
      _
    $region19: #{tpu_custom_call.1} parent=1 // pred_check_branch
      %349 = sbr.rel (0) target = $region21
    $region20: #{tpu_custom_call.1} parent=1 // pred_region
      %350 = dma.done [#allocation3], 4096
    $region21: #{tpu_custom_call.1} parent=1 // pred_fallthru
      _
    %351 = vsyncpa [#allocation3], 1

</llo_original>
